<compile_context>
chip_gen: v7x
topology: tpu7x:2x2x1
jax: 0.10.0
libtpu: 0.0.40
codegen_flags: <defaults>
</compile_context>

<pallas_src>
import functools

import jax
import jax.numpy as jnp
from jax.experimental import pallas as pl
from jax.experimental.pallas import tpu as pltpu


# ----------------------------------------------------------------------------
# Parameter setup (glue, plain JAX) — deterministic Gram-Schmidt orthogonal
# filters, mirroring the torch __init__ logic.
# ----------------------------------------------------------------------------
def gram_schmidt(vectors):
    """vectors: (N, 1, H, W). Orthonormalize over the leading axis (full-tensor
    inner products, matching torch's (v*u).sum() / x.norm(p=2) semantics)."""
    out = []
    for i in range(vectors.shape[0]):
        x = vectors[i]
        for y in out:
            x = x - (jnp.sum(x * y) / jnp.sum(y * y)) * y
        x = x / jnp.sqrt(jnp.sum(x * x))
        out.append(x)
    return jnp.stack(out, axis=0)


def initialize_orthogonal_filters(key, c, h, w):
    if h * w < c:
        n = c // (h * w)
        keys = jax.random.split(key, n)
        grams = [
            gram_schmidt(jax.random.uniform(keys[i], (h * w, 1, h, w), jnp.float32))
            for i in range(n)
        ]
        return jnp.concatenate(grams, axis=0)
    else:
        return gram_schmidt(jax.random.uniform(key, (c, 1, h, w), jnp.float32))


def build_constant_filter(key, c, h):
    # NOTE: Python-loop Gram-Schmidt traces O(C^2) ops — fine for the filter
    # sizes this module uses; it runs once at init.
    return initialize_orthogonal_filters(key, c, h, h).reshape(c, h, h)


# ----------------------------------------------------------------------------
# Pallas kernel: out[b, c] = sum_{hw} filter[c, hw] * x[b, c, hw]
# Grid: (C-blocks, B-blocks, HW-reduction-blocks); HW axis innermost (arbitrary)
# with a persistent VMEM f32 accumulator.
# ----------------------------------------------------------------------------
def _gst_kernel(x_ref, f_ref, o_ref, acc_ref, *, hw_total, thw, need_mask):
    k = pl.program_id(2)

    @pl.when(k == 0)
    def _():
        acc_ref[...] = jnp.zeros_like(acc_ref)

    x = x_ref[...].astype(jnp.float32)        # in-register upcast (VPU), bf16-safe on v5e
    f = f_ref[...].astype(jnp.float32)
    prod = x * f[None, :, :]
    if need_mask:
        # Last HW block may extend past the array; zero the padded tail so
        # stale/garbage VMEM contents never reach the accumulator.
        hw_idx = jax.lax.broadcasted_iota(jnp.int32, prod.shape, 2) + k * thw
        prod = jnp.where(hw_idx < hw_total, prod, 0.0)
    acc_ref[...] += jnp.sum(prod, axis=-1, keepdims=True)

    @pl.when(k == pl.num_programs(2) - 1)
    def _():
        o_ref[...] = acc_ref[...].astype(o_ref.dtype)


# ----------------------------------------------------------------------------
# Per-generation VMEM budget + dtype-aware tile selection.
# ----------------------------------------------------------------------------
def _vmem_plan():
    """Returns (target_x_block_bytes, vmem_limit_bytes) for this chip."""
    try:
        info = pltpu.get_tpu_info()
        phys = int(getattr(info, "vmem_capacity_bytes", 0)) or None
    except Exception:
        phys = None
    if phys is not None and phys >= 100 * 1024 * 1024:
        # v5e / v6e: 128 MiB physical VMEM -> larger blocks, 64 MiB scoped limit.
        return 16 * 1024 * 1024, 64 * 1024 * 1024
    # v7x (64 MiB per TC) or unknown: conservative.
    return 12 * 1024 * 1024, 48 * 1024 * 1024


def _choose_tiles(B, C, HW, x_isz, f_isz, target_x, vmem_limit):
    """Pick (tb, tc, thw) sized by actual bytes (dtype-aware).

    Accounting (conservative, so either filter-buffering mode fits):
      2 * x_block + 2 * filter_block + small <= ~85% of vmem_limit.
    """
    budget = int(0.85 * vmem_limit)
    row_x = HW * x_isz
    row_f = HW * f_isz

    if C * row_x <= target_x and 2 * C * (row_x + row_f) <= budget:
        # Case A: the whole (C, HW) slab fits -> tile over batch only.
        tc, thw = C, HW
        tb_budget = (budget - 2 * C * row_f) // (2 * C * row_x)
        tb_target = target_x // (C * row_x)
        tb = int(max(1, min(B, tb_budget, tb_target)))
    elif C > 8 and 8 * row_x <= target_x and 16 * (row_x + row_f) <= budget:
        # Case B: full-HW rows fit for >=8 channels -> tile over channels.
        tc_budget = budget // (2 * (row_x + row_f))
        tc_target = target_x // row_x
        tc = int(min(C, tc_budget, tc_target))
        tc = max(8, (tc // 8) * 8)                # sublane-aligned channel tile
        tb, thw = 1, HW
    else:
        # Case C: HW itself too large -> inner 'arbitrary' HW-reduction axis.
        tc = C if C <= 8 else 8
        per_elem = tc * 2 * (x_isz + f_isz)
        thw_budget = budget // per_elem
        thw_target = target_x // max(1, tc * x_isz)
        thw = int(min(HW, thw_budget, thw_target))
        thw = max(128, (thw // 128) * 128)        # lane-aligned HW tile
        tb = 1

    # v7x megacore: guarantee >=2 blocks along a parallel axis so both
    # TensorCores get work (no effect on single-TC v5e/v6e).
    if pl.cdiv(B, tb) == 1 and pl.cdiv(C, tc) == 1:
        if B >= 2:
            tb = -(-B // 2)
        elif C >= 16:
            tc = ((-(-C // 2) + 7) // 8) * 8

    return int(tb), int(tc), int(thw)


# ----------------------------------------------------------------------------
# Forward wrapper (== GramSchmidtTransform.forward)
# ----------------------------------------------------------------------------
def gram_schmidt_transform_forward(x, constant_filter, *, _tile_override=None):
    """x: (B, C, h, w) float32/bfloat16 NCHW; constant_filter: (C, H, H) f32.
    Returns (B, C, 1, 1)."""
    B, C, h, w = x.shape
    Cf, H, W = constant_filter.shape
    assert C == Cf

    f_use = constant_filter.astype(jnp.float32)
    if (h, w) != (H, W):
        # Fused adaptive_avg_pool2d (evenly-divisible case): pooling followed by
        # the per-channel weighted sum equals a weighted sum against an expanded
        # filter (each tap repeated over its kh x kw bin, scaled by 1/(kh*kw)).
        # Removes a full extra HBM pass over x.
        # TODO(synk): general (non-divisible) adaptive_avg_pool2d bins not implemented.
        assert h % H == 0 and w % W == 0, "only divisible spatial pooling supported"
        kh, kw = h // H, w // W
        f_use = jnp.repeat(jnp.repeat(f_use, kh, axis=1), kw, axis=2) / float(kh * kw)

    HW = h * w
    x_flat = x.reshape(B, C, HW)              # stream x in its native dtype
    f_stream_dtype = x.dtype if jnp.issubdtype(x.dtype, jnp.floating) else jnp.float32
    f_flat = f_use.reshape(C, HW).astype(f_stream_dtype)   # bf16 x -> bf16 filter traffic
    out_dtype = jnp.result_type(x.dtype, jnp.float32)

    x_isz = int(jnp.dtype(x.dtype).itemsize)
    f_isz = int(jnp.dtype(f_stream_dtype).itemsize)
    target_x_bytes, vmem_limit = _vmem_plan()

    if _tile_override is not None:
        tb, tc, thw = _tile_override
    else:
        tb, tc, thw = _choose_tiles(B, C, HW, x_isz, f_isz, target_x_bytes, vmem_limit)

    nk = pl.cdiv(HW, thw)
    need_mask = (nk * thw != HW)
    grid = (pl.cdiv(C, tc), pl.cdiv(B, tb), nk)   # C outer, B inner, HW reduction innermost

    kernel = functools.partial(_gst_kernel, hw_total=HW, thw=thw, need_mask=need_mask)

    cost = pl.CostEstimate(
        flops=2 * B * C * HW,
        transcendentals=0,
        bytes_accessed=int(x_flat.size) * x_isz
        + int(f_flat.size) * f_isz
        + B * C * int(jnp.dtype(out_dtype).itemsize),
    )

    def run(single_buffer_filter):
        f_kwargs = {}
        if single_buffer_filter:
            # Filter block index is constant across the inner B loop -> fully
            # resident; a single VMEM buffer frees room for larger x tiles.
            f_kwargs["pipeline_mode"] = pl.Buffered(1)
        return pl.pallas_call(
            kernel,
            out_shape=jax.ShapeDtypeStruct((B, C, 1), out_dtype),
            grid=grid,
            in_specs=[
                pl.BlockSpec((tb, tc, thw), lambda ci, bi, k: (bi, ci, k)),
                pl.BlockSpec((tc, thw), lambda ci, bi, k: (ci, k), **f_kwargs),
            ],
            out_specs=pl.BlockSpec((tb, tc, 1), lambda ci, bi, k: (bi, ci, 0)),
            scratch_shapes=[pltpu.VMEM((tb, tc, 1), jnp.float32)],
            compiler_params=pltpu.CompilerParams(
                dimension_semantics=("parallel", "parallel", "arbitrary"),
                vmem_limit_bytes=vmem_limit,
            ),
            cost_estimate=cost,
        )(x_flat, f_flat)

    want_single = (nk == 1) and hasattr(pl, "Buffered")
    if want_single:
        try:
            out = run(True)
        except Exception:
            out = run(False)   # fall back to default double-buffered filter spec
    else:
        out = run(False)

    return out.reshape(B, C, 1, 1)


def ortho_attention(constant_filter, x):
    """Attention.forward: apply the transform until the spatial size is 1,
    then flatten to (B, C)."""
    while x.shape[-1] > 1:
        x = gram_schmidt_transform_forward(x, constant_filter)
    return x.reshape(x.shape[0], -1)


# ----------------------------------------------------------------------------
# Demo / self-check
# ----------------------------------------------------------------------------
if __name__ == "__main__":
    B, C, H = 2, 4, 16

    key = jax.random.PRNGKey(0)
    k_filter, k_x, k_x2, k_f2, k_x3 = jax.random.split(key, 5)

    constant_filter = build_constant_filter(k_filter, C, H)          # (C, H, H)
    x = jax.random.normal(k_x, (B, C, H, H), dtype=jnp.float32)      # (B, C, H, W)

    # 1) Direct path (h == H).
    out = jax.block_until_ready(gram_schmidt_transform_forward(x, constant_filter))
    ref = jnp.sum(constant_filter[None] * x, axis=(-1, -2), keepdims=True)
    assert out.shape == (B, C, 1, 1)
    assert jnp.allclose(out, ref, atol=1e-5, rtol=1e-5)

    # 2) Fused adaptive-avg-pool path (h != H): 32x32 pooled to 16x16 inside the kernel.
    x2 = jax.random.normal(k_x2, (B, C, 2 * H, 2 * H), dtype=jnp.float32)
    out2 = jax.block_until_ready(gram_schmidt_transform_forward(x2, constant_filter))
    pooled = x2.reshape(B, C, H, 2, H, 2).mean(axis=(3, 5))
    ref2 = jnp.sum(constant_filter[None] * pooled, axis=(-1, -2), keepdims=True)
    assert jnp.allclose(out2, ref2, atol=1e-4, rtol=1e-4)

    # 3) bf16 input: x AND filter streamed as bf16, accumulated in f32.
    x_bf = x.astype(jnp.bfloat16)
    out_bf = jax.block_until_ready(gram_schmidt_transform_forward(x_bf, constant_filter))
    f_bf = constant_filter.astype(jnp.bfloat16).astype(jnp.float32)
    ref_bf = jnp.sum(f_bf[None] * x_bf.astype(jnp.float32), axis=(-1, -2), keepdims=True)
    assert out_bf.dtype == jnp.float32
    assert jnp.allclose(out_bf, ref_bf, atol=2e-3, rtol=2e-3)

    # 4) HW-reduction path with tail masking (forced tiles: HW=144 split into 128+16).
    H2 = 12
    filt2 = build_constant_filter(k_f2, C, H2)
    x3 = jax.random.normal(k_x3, (B, C, H2, H2), dtype=jnp.float32)
    out3 = jax.block_until_ready(
        gram_schmidt_transform_forward(x3, filt2, _tile_override=(1, C, 128)))
    ref3 = jnp.sum(filt2[None] * x3, axis=(-1, -2), keepdims=True)
    assert jnp.allclose(out3, ref3, atol=1e-5, rtol=1e-5)

    # 5) Attention wrapper (loops FWT until spatial size is 1) -> (B, C).
    att = jax.block_until_ready(ortho_attention(constant_filter, x))
    assert att.shape == (B, C)

    print("KERNEL_OK")
</pallas_src>

<mosaic_0001>
module attributes {stable_mosaic.version = 11 : i64} {
  func.func @_gst_kernel(%arg0: i32, %arg1: i32, %arg2: i32, %arg3: memref<1x4x256xf32, #tpu.memory_space<vmem>>, %arg4: memref<4x256xf32, #tpu.memory_space<vmem>>, %arg5: memref<1x4x1xf32, #tpu.memory_space<vmem>>, %arg6: memref<1x4x1xf32, #tpu.memory_space<vmem>>) attributes {dimension_semantics = [#tpu.dimension_semantics<parallel>, #tpu.dimension_semantics<parallel>, #tpu.dimension_semantics<arbitrary>], iteration_bounds = array<i64: 1, 2, 1>, scalar_prefetch = 0 : i64, scratch_operands = 1 : i64, tpu.core_type = #tpu.core_type<tc>, window_params = [{transform_indices = @transform_0, window_bounds = array<i64: 1, 4, 256>}, {pipeline_mode = #tpu.pipeline_mode<synchronous>, transform_indices = @transform_1, window_bounds = array<i64: 4, 256>}, {transform_indices = @transform_2, window_bounds = array<i64: 1, 4, 1>}]} {
    %c0_i32 = arith.constant 0 : i32
    %0 = arith.cmpi eq, %arg2, %c0_i32 : i32
    %1 = arith.extui %0 : i1 to i32
    %c0_i32_0 = arith.constant 0 : i32
    %2 = arith.cmpi ne, %1, %c0_i32_0 : i32
    scf.if %2 {
      %cst_13 = arith.constant 0.000000e+00 : f32
      %15 = vector.broadcast %cst_13 : f32 to vector<1x4x1xf32>
      %c0_14 = arith.constant 0 : index
      %c0_15 = arith.constant 0 : index
      %c0_16 = arith.constant 0 : index
      %16 = vector.load %arg6[%c0_14, %c0_15, %c0_16] : memref<1x4x1xf32, #tpu.memory_space<vmem>>, vector<1x4x1xf32>
      tpu.vector_store %arg6[%c0_14, %c0_15, %c0_16], %15 {strides = array<i32>} : memref<1x4x1xf32, #tpu.memory_space<vmem>>, vector<1x4x1xf32>,
    } else {
    }
    %c0 = arith.constant 0 : index
    %c0_1 = arith.constant 0 : index
    %c0_2 = arith.constant 0 : index
    %3 = vector.load %arg3[%c0, %c0_1, %c0_2] : memref<1x4x256xf32, #tpu.memory_space<vmem>>, vector<1x4x256xf32>
    %c0_3 = arith.constant 0 : index
    %c0_4 = arith.constant 0 : index
    %4 = vector.load %arg4[%c0_3, %c0_4] : memref<4x256xf32, #tpu.memory_space<vmem>>, vector<4x256xf32>
    %5 = vector.shape_cast %4 : vector<4x256xf32> to vector<1x4x256xf32>
    %6 = arith.mulf %3, %5 : vector<1x4x256xf32>
    %c0_5 = arith.constant 0 : index
    %c0_6 = arith.constant 0 : index
    %c0_7 = arith.constant 0 : index
    %7 = vector.load %arg6[%c0_5, %c0_6, %c0_7] : memref<1x4x1xf32, #tpu.memory_space<vmem>>, vector<1x4x1xf32>
    %cst = arith.constant dense<0.000000e+00> : vector<1x4xf32>
    %8 = vector.multi_reduction <add>, %6, %cst [2] : vector<1x4x256xf32> to vector<1x4xf32>
    %9 = vector.shape_cast %8 : vector<1x4xf32> to vector<1x4x1xf32>
    %10 = arith.addf %7, %9 : vector<1x4x1xf32>
    %c0_8 = arith.constant 0 : index
    %c0_9 = arith.constant 0 : index
    %c0_10 = arith.constant 0 : index
    %11 = vector.load %arg6[%c0_8, %c0_9, %c0_10] : memref<1x4x1xf32, #tpu.memory_space<vmem>>, vector<1x4x1xf32>
    tpu.vector_store %arg6[%c0_8, %c0_9, %c0_10], %10 {strides = array<i32>} : memref<1x4x1xf32, #tpu.memory_space<vmem>>, vector<1x4x1xf32>,
    %c0_i32_11 = arith.constant 0 : i32
    %12 = arith.cmpi eq, %arg2, %c0_i32_11 : i32
    %13 = arith.extui %12 : i1 to i32
    %c0_i32_12 = arith.constant 0 : i32
    %14 = arith.cmpi ne, %13, %c0_i32_12 : i32
    scf.if %14 {
      %c0_13 = arith.constant 0 : index
      %c0_14 = arith.constant 0 : index
      %c0_15 = arith.constant 0 : index
      %15 = vector.load %arg6[%c0_13, %c0_14, %c0_15] : memref<1x4x1xf32, #tpu.memory_space<vmem>>, vector<1x4x1xf32>
      %c0_16 = arith.constant 0 : index
      %c0_17 = arith.constant 0 : index
      %c0_18 = arith.constant 0 : index
      %16 = vector.load %arg5[%c0_16, %c0_17, %c0_18] : memref<1x4x1xf32, #tpu.memory_space<vmem>>, vector<1x4x1xf32>
      tpu.vector_store %arg5[%c0_16, %c0_17, %c0_18], %15 {strides = array<i32>} : memref<1x4x1xf32, #tpu.memory_space<vmem>>, vector<1x4x1xf32>,
    } else {
    }
    return
  }
  func.func @transform_0(%arg0: i32, %arg1: i32, %arg2: i32) -> (i32, i32, i32) {
    %c0_i32 = arith.constant 0 : i32
    return %arg1, %arg0, %arg2 : i32, i32, i32
  }
  func.func @transform_1(%arg0: i32, %arg1: i32, %arg2: i32) -> (i32, i32) {
    %c0_i32 = arith.constant 0 : i32
    return %arg0, %arg2 : i32, i32
  }
  func.func @transform_2(%arg0: i32, %arg1: i32, %arg2: i32) -> (i32, i32, i32) {
    %c0_i32 = arith.constant 0 : i32
    %c0_i32_0 = arith.constant 0 : i32
    return %arg1, %arg0, %c0_i32 : i32, i32, i32
  }
}

module attributes {stable_mosaic.version = 11 : i64} {
  func.func @_gst_kernel(%arg0: i32, %arg1: i32, %arg2: i32, %arg3: memref<1x4x256xf32, #tpu.memory_space<vmem>>, %arg4: memref<4x256xf32, #tpu.memory_space<vmem>>, %arg5: memref<1x4x1xf32, #tpu.memory_space<vmem>>, %arg6: memref<1x4x1xf32, #tpu.memory_space<vmem>>) attributes {dimension_semantics = [#tpu.dimension_semantics<parallel>, #tpu.dimension_semantics<parallel>, #tpu.dimension_semantics<arbitrary>], iteration_bounds = array<i64: 1, 2, 1>, scalar_prefetch = 0 : i64, scratch_operands = 1 : i64, tpu.core_type = #tpu.core_type<tc>, window_params = [{transform_indices = @transform_0, window_bounds = array<i64: 1, 4, 256>}, {transform_indices = @transform_1, window_bounds = array<i64: 4, 256>}, {transform_indices = @transform_2, window_bounds = array<i64: 1, 4, 1>}]} {
    %c0_i32 = arith.constant 0 : i32
    %0 = arith.cmpi eq, %arg2, %c0_i32 : i32
    %1 = arith.extui %0 : i1 to i32
    %c0_i32_0 = arith.constant 0 : i32
    %2 = arith.cmpi ne, %1, %c0_i32_0 : i32
    scf.if %2 {
      %cst_13 = arith.constant 0.000000e+00 : f32
      %15 = vector.broadcast %cst_13 : f32 to vector<1x4x1xf32>
      %c0_14 = arith.constant 0 : index
      %c0_15 = arith.constant 0 : index
      %c0_16 = arith.constant 0 : index
      %16 = vector.load %arg6[%c0_14, %c0_15, %c0_16] : memref<1x4x1xf32, #tpu.memory_space<vmem>>, vector<1x4x1xf32>
      tpu.vector_store %arg6[%c0_14, %c0_15, %c0_16], %15 {strides = array<i32>} : memref<1x4x1xf32, #tpu.memory_space<vmem>>, vector<1x4x1xf32>,
    } else {
    }
    %c0 = arith.constant 0 : index
    %c0_1 = arith.constant 0 : index
    %c0_2 = arith.constant 0 : index
    %3 = vector.load %arg3[%c0, %c0_1, %c0_2] : memref<1x4x256xf32, #tpu.memory_space<vmem>>, vector<1x4x256xf32>
    %c0_3 = arith.constant 0 : index
    %c0_4 = arith.constant 0 : index
    %4 = vector.load %arg4[%c0_3, %c0_4] : memref<4x256xf32, #tpu.memory_space<vmem>>, vector<4x256xf32>
    %5 = vector.shape_cast %4 : vector<4x256xf32> to vector<1x4x256xf32>
    %6 = arith.mulf %3, %5 : vector<1x4x256xf32>
    %c0_5 = arith.constant 0 : index
    %c0_6 = arith.constant 0 : index
    %c0_7 = arith.constant 0 : index
    %7 = vector.load %arg6[%c0_5, %c0_6, %c0_7] : memref<1x4x1xf32, #tpu.memory_space<vmem>>, vector<1x4x1xf32>
    %cst = arith.constant dense<0.000000e+00> : vector<1x4xf32>
    %8 = vector.multi_reduction <add>, %6, %cst [2] : vector<1x4x256xf32> to vector<1x4xf32>
    %9 = vector.shape_cast %8 : vector<1x4xf32> to vector<1x4x1xf32>
    %10 = arith.addf %7, %9 : vector<1x4x1xf32>
    %c0_8 = arith.constant 0 : index
    %c0_9 = arith.constant 0 : index
    %c0_10 = arith.constant 0 : index
    %11 = vector.load %arg6[%c0_8, %c0_9, %c0_10] : memref<1x4x1xf32, #tpu.memory_space<vmem>>, vector<1x4x1xf32>
    tpu.vector_store %arg6[%c0_8, %c0_9, %c0_10], %10 {strides = array<i32>} : memref<1x4x1xf32, #tpu.memory_space<vmem>>, vector<1x4x1xf32>,
    %c0_i32_11 = arith.constant 0 : i32
    %12 = arith.cmpi eq, %arg2, %c0_i32_11 : i32
    %13 = arith.extui %12 : i1 to i32
    %c0_i32_12 = arith.constant 0 : i32
    %14 = arith.cmpi ne, %13, %c0_i32_12 : i32
    scf.if %14 {
      %c0_13 = arith.constant 0 : index
      %c0_14 = arith.constant 0 : index
      %c0_15 = arith.constant 0 : index
      %15 = vector.load %arg6[%c0_13, %c0_14, %c0_15] : memref<1x4x1xf32, #tpu.memory_space<vmem>>, vector<1x4x1xf32>
      %c0_16 = arith.constant 0 : index
      %c0_17 = arith.constant 0 : index
      %c0_18 = arith.constant 0 : index
      %16 = vector.load %arg5[%c0_16, %c0_17, %c0_18] : memref<1x4x1xf32, #tpu.memory_space<vmem>>, vector<1x4x1xf32>
      tpu.vector_store %arg5[%c0_16, %c0_17, %c0_18], %15 {strides = array<i32>} : memref<1x4x1xf32, #tpu.memory_space<vmem>>, vector<1x4x1xf32>,
    } else {
    }
    return
  }
  func.func @transform_0(%arg0: i32, %arg1: i32, %arg2: i32) -> (i32, i32, i32) {
    %c0_i32 = arith.constant 0 : i32
    return %arg1, %arg0, %arg2 : i32, i32, i32
  }
  func.func @transform_1(%arg0: i32, %arg1: i32, %arg2: i32) -> (i32, i32) {
    %c0_i32 = arith.constant 0 : i32
    return %arg0, %arg2 : i32, i32
  }
  func.func @transform_2(%arg0: i32, %arg1: i32, %arg2: i32) -> (i32, i32, i32) {
    %c0_i32 = arith.constant 0 : i32
    %c0_i32_0 = arith.constant 0 : i32
    return %arg1, %arg0, %c0_i32 : i32, i32, i32
  }
}

</mosaic_0001>

<llo_original>
// kernel: tpu_custom_call.1
$region0: #{tpu_custom_call.1}
  #allocation0 [shape = 'u32[]', space=smem, size = 0x4, offset = 0x4, fixed_abs, tag = 'smem constant byte address 0x4 - core index']
  #allocation1 [shape = 'u32[144,128]{1,0:T(1,128)}', space=vmem, size = 0x12000, scoped, tag = 'internal scratch']
  #allocation2 [shape = 'f32[1,4,1]{2,1,0:T(4,128)}', space=vmem, size = 0x800, scoped, tag = 'scratch operand']
  %s0 = inlined_call_operand.hbm [shape: f32[2,4,256], index: 0, kind: input, shape index: {}]
  %s1 = inlined_call_operand.hbm [shape: f32[4,256], index: 1, kind: input, shape index: {}]
  %s2 = inlined_call_operand.vmem [shape: f32[2,4,1], index: 2, kind: output, shape index: {}]
  %s3 = sld [smem:[#allocation0]]
  $region57: #{tpu_custom_call.1} parent=0
    _
  %s5 = ssub.s32 1, %s3
  %s6 = scalar_select 0, %s5, %s3
  $region1: #{tpu_custom_call.1} parent=0
    #allocation3 [shape = 'u8[8192]{0}', space=vmem, size = 0x2000, scoped, tag = 'input window, operand 0']
    #allocation4 [shape = 's32[2]{0}', space=sflag, size = 0x8, scoped, tag = 'scoped memory for tpu_custom_call.1']
    #allocation5 [shape = 'u8[4096]{0}', space=vmem, size = 0x1000, scoped, tag = 'input window, operand 1, single buffered']
    #allocation6 [shape = 's32[1]{0}', space=sflag, size = 0x4, scoped, tag = 'scoped memory for tpu_custom_call.1']
    %7 = vsyncpa [#allocation4], 0
    %s8 = scalar_lea.sflag [#allocation4], 1
    %9 = vsyncpa %s8, 0
    %10 = vsyncpa [#allocation6], 0
    loop: start=0, step=1, limit=4
    $region2: #{tpu_custom_call.1} parent=1 // loop_pre_header
      _
    $region3: #{tpu_custom_call.1} parent=1 // loop_header
      %s12 = sphi 0, %s16
      %p13 = scmp.ge.s32.totalorder %s12, 4
      %s19 = sphi 0, %s38
      %s20 = sphi 0, %s34
      %s21 = sphi 0, %s30
      %s22 = sphi 0, %s19
      %s23 = sphi 0, %s20
      %s24 = sphi 0, %s21
      %s25 = sphi 0, %s22
      %s26 = sphi 0, %s23
      %s27 = sphi 0, %s24
      %s45 = sphi 0, %s47
      %s48 = sphi 0, %s45
      %s49 = sphi 0, %s48
      %s65 = sphi 0, %s49
      %s73 = sphi 0, %s75
      %s76 = sphi 0, %s73
      %s77 = sphi 0, %s76
      %s93 = sphi 0, %s77
      %s101 = sphi 0, %s103
      %s104 = sphi 0, %s101
      %s105 = sphi 0, %s104
      %s121 = sphi 0, %s105
    $region4: #{tpu_custom_call.1} parent=1 // loop_header_branch
      %15 = sbr.rel (%p13) target = $region8
    $region5: #{tpu_custom_call.1} parent=1 // loop_body
      %s17 = ssub.s32 %s12, 1
      %s18 = ssub.s32 %s12, 2
      %s28 = sadd.s32 1, %s21
      %p29 = scmp.ge.s32.totalorder %s28, 1
      %s30 = scalar_select %p29, 0, %s28
      %s31 = sadd.s32 1, %s20
      %s32 = scalar_select %p29, %s31, %s20
      %p33 = scmp.ge.s32.totalorder %s32, 2
      %s34 = scalar_select %p33, 0, %s32
      %s35 = sadd.s32 1, %s19
      %s36 = scalar_select %p33, %s35, %s19
      %p37 = scmp.ge.s32.totalorder %s36, 1
      %s38 = scalar_select %p37, 0, %s36
      %s39 = ssub.s32 %s20, %s34
      %s40 = ssub.s32 %s19, %s38
      %s41 = sor.u32 %s39, %s40
      %s42 = ssub.s32 %s21, %s30
      %s43 = sor.u32 %s41, %s42
      %p44 = scmp.eq.s32.totalorder %s43, 0
      %s46 = sadd.s32 %s45, 1
      %s47 = scalar_select %p44, %s45, %s46
      %p50 = pneg %p44
      %p51 = scmp.eq.s32.totalorder %s12, 1
      %p52 = por %p50, %p51
      %p53 = scmp.ne.s32.totalorder %s45, %s48
      %p54 = scmp.eq.s32.totalorder %s12, 0
      %p55 = por %p53, %p54
      %p56 = scmp.ne.s32.totalorder %s45, %s48
      %p57 = scmp.eq.s32.totalorder %s17, 1
      %p58 = por %p56, %p57
      %p59 = scmp.ne.s32.totalorder %s48, %s49
      %p60 = scmp.eq.s32.totalorder %s17, 0
      %p61 = por %p59, %p60
      %p62 = scmp.ne.s32.totalorder %s48, %s49
      %p63 = scmp.eq.s32.totalorder %s18, 1
      %p64 = por %p62, %p63
      %p66 = scmp.ne.s32.totalorder %s49, %s65
      %p67 = scmp.eq.s32.totalorder %s18, 0
      %p68 = por %p66, %p67
      %s69 = ssub.s32 %s19, %s38
      %s70 = ssub.s32 %s21, %s30
      %s71 = sor.u32 %s69, %s70
      %p72 = scmp.eq.s32.totalorder %s71, 0
      %s74 = sadd.s32 %s73, 1
      %s75 = scalar_select %p72, %s73, %s74
      %p78 = pneg %p72
      %p79 = scmp.eq.s32.totalorder %s12, 1
      %p80 = por %p78, %p79
      %p81 = scmp.ne.s32.totalorder %s73, %s76
      %p82 = scmp.eq.s32.totalorder %s12, 0
      %p83 = por %p81, %p82
      %p84 = scmp.ne.s32.totalorder %s73, %s76
      %p85 = scmp.eq.s32.totalorder %s17, 1
      %p86 = por %p84, %p85
      %p87 = scmp.ne.s32.totalorder %s76, %s77
      %p88 = scmp.eq.s32.totalorder %s17, 0
      %p89 = por %p87, %p88
      %p90 = scmp.ne.s32.totalorder %s76, %s77
      %p91 = scmp.eq.s32.totalorder %s18, 1
      %p92 = por %p90, %p91
      %p94 = scmp.ne.s32.totalorder %s77, %s93
      %p95 = scmp.eq.s32.totalorder %s18, 0
      %p96 = por %p94, %p95
      %s97 = ssub.s32 %s20, %s34
      %s98 = ssub.s32 %s19, %s38
      %s99 = sor.u32 %s97, %s98
      %p100 = scmp.eq.s32.totalorder %s99, 0
      %s102 = sadd.s32 %s101, 1
      %s103 = scalar_select %p100, %s101, %s102
      %p106 = pneg %p100
      %p107 = scmp.eq.s32.totalorder %s12, 1
      %p108 = por %p106, %p107
      %p109 = scmp.ne.s32.totalorder %s101, %s104
      %p110 = scmp.eq.s32.totalorder %s12, 0
      %p111 = por %p109, %p110
      %p112 = scmp.ne.s32.totalorder %s101, %s104
      %p113 = scmp.eq.s32.totalorder %s17, 1
      %p114 = por %p112, %p113
      %p115 = scmp.ne.s32.totalorder %s104, %s105
      %p116 = scmp.eq.s32.totalorder %s17, 0
      %p117 = por %p115, %p116
      %p118 = scmp.ne.s32.totalorder %s104, %s105
      %p119 = scmp.eq.s32.totalorder %s18, 1
      %p120 = por %p118, %p119
      %p122 = scmp.ne.s32.totalorder %s105, %s121
      %p123 = scmp.eq.s32.totalorder %s18, 0
      %p124 = por %p122, %p123
      %p125 = scmp.le.s32.totalorder 1, %s12
      %p126 = scmp.lt.s32.totalorder %s12, 3
      %p127 = pnand %p125, %p126
      %p128 = pneg %p127
      // Predicated region
      $region9: #{tpu_custom_call.1} parent=5 // pred_check
        _
      $region10: #{tpu_custom_call.1} parent=5 // pred_check_branch
        %130 = sbr.rel (%p127) target = $region12
      $region11: #{tpu_custom_call.1} parent=5 // pred_region
        %s131 = ssub.s32 %s12, 1
        // Predicated region
        $region13: #{tpu_custom_call.1} parent=11 // pred_check
          %p132 = pneg %p89
        $region14: #{tpu_custom_call.1} parent=11 // pred_check_branch
          %134 = sbr.rel (%p132) target = $region16
        $region15: #{tpu_custom_call.1} parent=11 // pred_region
          %s135 = smul.u32 2, %s24
          %s137 = ssub.s32 128, 128
          %138 = vsyncadd [#allocation6], %s137
          %s139 = smul.addr %s22, 2
          %s140 = sadd.s32 %s135, %s139
          %s141 = smul.addr %s140, 64
          %s142 = scalar_lea.hbm %s1, %s141
          %s144 = sshll.u32 [#allocation5], 4
          %s145 = int_to_ptr.vmem [resolvable:$true] %s144
          %147 = dma.hbm_to_vmem [thread:$0]  %s142, 128, %s145, [#allocation6]
        $region16: #{tpu_custom_call.1} parent=11 // pred_fallthru
          _
      $region12: #{tpu_custom_call.1} parent=5 // pred_fallthru
        _
      %p148 = scmp.lt.s32.totalorder %s12, 2
      // Predicated region
      $region17: #{tpu_custom_call.1} parent=5 // pred_check
        %p149 = pneg %p148
      $region18: #{tpu_custom_call.1} parent=5 // pred_check_branch
        %151 = sbr.rel (%p149) target = $region20
      $region19: #{tpu_custom_call.1} parent=5 // pred_region
        // Predicated region
        $region21: #{tpu_custom_call.1} parent=19 // pred_check
          %p152 = pneg %p55
        $region22: #{tpu_custom_call.1} parent=19 // pred_check_branch
          %154 = sbr.rel (%p152) target = $region24
        $region23: #{tpu_custom_call.1} parent=19 // pred_region
          %s155 = sand.u32 %s45, 1
          %s156 = scalar_lea.sflag [#allocation4], %s155
          %s157 = sand.u32 %s45, 1
          %s158 = smul.addr %s157, 8
          %s159 = scalar_lea.vmem [#allocation3], %s158
          %s160 = smul.u32 2, %s21
          %s162 = ssub.s32 128, 128
          %163 = vsyncadd %s156, %s162
          %s164 = smul.addr %s19, 2
          %s165 = sadd.s32 %s160, %s164
          %s166 = smul.addr %s20, 2
          %s167 = sadd.s32 %s165, %s166
          %s168 = smul.addr %s167, 64
          %s169 = scalar_lea.hbm %s0, %s168
          %s171 = sshll.u32 %s159, 4
          %s172 = int_to_ptr.vmem [resolvable:$true] %s171
          %174 = dma.hbm_to_vmem [thread:$0]  %s169, 128, %s172, %s156
        $region24: #{tpu_custom_call.1} parent=19 // pred_fallthru
          _
      $region20: #{tpu_custom_call.1} parent=5 // pred_fallthru
        _
      %p175 = scmp.le.s32.totalorder 1, %s12
      %p176 = scmp.lt.s32.totalorder %s12, 3
      %p177 = pnand %p175, %p176
      %p178 = pneg %p177
      // Predicated region
      $region25: #{tpu_custom_call.1} parent=5 // pred_check
        _
      $region26: #{tpu_custom_call.1} parent=5 // pred_check_branch
        %180 = sbr.rel (%p177) target = $region28
      $region27: #{tpu_custom_call.1} parent=5 // pred_region
        %s181 = ssub.s32 %s12, 1
        %s182 = sand.u32 %s48, 1
        %s183 = scalar_lea.sflag [#allocation4], %s182
        %s184 = sand.u32 %s48, 1
        %s185 = smul.addr %s184, 8
        %s186 = scalar_lea.vmem [#allocation3], %s185
        // Predicated region
        $region29: #{tpu_custom_call.1} parent=27 // pred_check
          %p187 = pneg %p61
        $region30: #{tpu_custom_call.1} parent=27 // pred_check_branch
          %189 = sbr.rel (%p187) target = $region32
        $region31: #{tpu_custom_call.1} parent=27 // pred_region
          %190 = dma.done %s183, 128
        $region32: #{tpu_custom_call.1} parent=27 // pred_fallthru
          _
        // Predicated region
        $region33: #{tpu_custom_call.1} parent=27 // pred_check
          %p191 = pneg %p89
        $region34: #{tpu_custom_call.1} parent=27 // pred_check_branch
          %193 = sbr.rel (%p191) target = $region36
        $region35: #{tpu_custom_call.1} parent=27 // pred_region
          %194 = dma.done [#allocation6], 128
        $region36: #{tpu_custom_call.1} parent=27 // pred_fallthru
          _
        %s195 = sand.u32 %s48, 1
        %s196 = scalar_lea.sflag [#allocation4], %s195
        %s197 = sand.u32 %s48, 1
        %s198 = smul.addr %s197, 8
        %s199 = scalar_lea.vmem [#allocation3], %s198
        %p200 = pneg %p61
        %p201 = pneg %p58
        %p202 = pneg %p89
        %p203 = pneg %p86
        %p204 = pneg %p117
        %p205 = pneg %p114
        %p206 = scmp.lt.s32.totalorder %s23, 1
        %s207 = scalar_select %p206, %s23, 1
        %p208 = scmp.lt.s32.totalorder %s22, 0
        %s209 = scalar_select %p208, %s22, 0
        %s210 = sadd.s32 %s209, %s207
        %s211 = smul.addr %s210, 4
        %s212 = scalar_lea.vmem %s2, %s211
        %s213 = smul.u32 2, %s24
        %s214 = smul.u32 2, %s24
        %p215 = scmp.lt.s32.totalorder %s23, 1
        %s216 = scalar_select %p215, %s23, 1
        %p217 = scmp.lt.s32.totalorder %s22, 0
        %s218 = scalar_select %p217, %s22, 0
        %s219 = sadd.s32 %s218, %s216
        %s220 = smul.addr %s219, 4
        %s221 = scalar_lea.vmem %s2, %s220
        %p222 = scmp.eq.s32.totalorder %s24, 0
        // Predicated region
        $region37: #{tpu_custom_call.1} parent=27 // pred_check
          %p223 = pneg %p222
        $region38: #{tpu_custom_call.1} parent=27 // pred_check_branch
          %225 = sbr.rel (%p223) target = $region40
        $region39: #{tpu_custom_call.1} parent=27 // pred_region
          %vm226 = vcmask 3072
          %227 = vst.msk [vmem:[#allocation2] sm:$0xf] %vm226, 0.0
        $region40: #{tpu_custom_call.1} parent=27 // pred_fallthru
          _
        %v228 = vld [vmem:[%s186] sm:$0xff]
        %v229 = vld [vmem:[#allocation5] sm:$0xff]
        %v230 = vmul.f32 %v228, %v229
        %v231 = vld [vmem:[#allocation2] sm:$0xf]
        %v233 = vcombine.high %v230, %v230
        %vm235 = vcmask 1043456
        %v236 = vsel %vm235, %v230, 0.0
        %v237 = vsel %vm235, %v233, 0.0
        %v238 = vadd.f32 %v236, %v237
        %239 = vadd.xlane.f32.xlu0 %v238
        %v240 = vpop.xlane.xlu0 %239
        %v241 = vadd.f32 %v231, %v240
        %vm242 = vcmask 3072
        %243 = vst.msk [vmem:[#allocation2] sm:$0xf] %vm242, %v241
        // Predicated region
        $region41: #{tpu_custom_call.1} parent=27 // pred_check
          %p244 = pneg %p222
        $region42: #{tpu_custom_call.1} parent=27 // pred_check_branch
          %246 = sbr.rel (%p244) target = $region44
        $region43: #{tpu_custom_call.1} parent=27 // pred_region
          %v247 = vld [vmem:[#allocation2] sm:$0xf]
          %248 = vst.msk [vmem:[%s221] sm:$0xf] %vm242, %v247
        $region44: #{tpu_custom_call.1} parent=27 // pred_fallthru
          _
        %p249 = scmp.lt.s32.totalorder %s23, 1
        %s250 = scalar_select %p249, %s23, 1
        %p251 = scmp.lt.s32.totalorder %s22, 0
        %s252 = scalar_select %p251, %s22, 0
        %s253 = sadd.s32 %s252, %s250
        %s254 = smul.addr %s253, 4
        %s255 = scalar_lea.vmem %s2, %s254
        // Predicated region
        $region45: #{tpu_custom_call.1} parent=27 // pred_check
          %p256 = pneg %p114
        $region46: #{tpu_custom_call.1} parent=27 // pred_check_branch
          %258 = sbr.rel (%p256) target = $region48
        $region47: #{tpu_custom_call.1} parent=27 // pred_region
          _
        $region48: #{tpu_custom_call.1} parent=27 // pred_fallthru
          _
      $region28: #{tpu_custom_call.1} parent=5 // pred_fallthru
        _
      %p259 = scmp.le.s32.totalorder 2, %s12
      // Predicated region
      $region49: #{tpu_custom_call.1} parent=5 // pred_check
        %p260 = pneg %p259
      $region50: #{tpu_custom_call.1} parent=5 // pred_check_branch
        %262 = sbr.rel (%p260) target = $region52
      $region51: #{tpu_custom_call.1} parent=5 // pred_region
        %s263 = ssub.s32 %s12, 2
        // Predicated region
        $region53: #{tpu_custom_call.1} parent=51 // pred_check
          %p264 = pneg %p120
        $region54: #{tpu_custom_call.1} parent=51 // pred_check_branch
          %266 = sbr.rel (%p264) target = $region56
        $region55: #{tpu_custom_call.1} parent=51 // pred_region
          %p267 = scmp.lt.s32.totalorder %s26, 1
          %s268 = scalar_select %p267, %s26, 1
          %p269 = scmp.lt.s32.totalorder %s25, 0
          %s270 = scalar_select %p269, %s25, 0
          %s271 = sadd.s32 %s270, %s268
          %s272 = smul.addr %s271, 4
          %s273 = scalar_lea.vmem %s2, %s272
        $region56: #{tpu_custom_call.1} parent=51 // pred_fallthru
          _
      $region52: #{tpu_custom_call.1} parent=5 // pred_fallthru
        _
    $region6: #{tpu_custom_call.1} parent=1 // loop_footer
      %s16 = sadd.s32 1, %s12
    $region7: #{tpu_custom_call.1} parent=1 // loop_footer_branch
      %11 = sbr.rel target = $region3
    $region8: #{tpu_custom_call.1} parent=1 // loop_exit
      _
    %274 = vsyncpa [#allocation4], 1
    %s275 = scalar_lea.sflag [#allocation4], 1
    %276 = vsyncpa %s275, 1
    %277 = vsyncpa [#allocation6], 1

// kernel: tpu_custom_call.1
$region0: #{tpu_custom_call.1}
  #allocation0 [shape = 'u32[]', space=smem, size = 0x4, offset = 0x4, fixed_abs, tag = 'smem constant byte address 0x4 - core index']
  #allocation1 [shape = 'u32[144,128]{1,0:T(1,128)}', space=vmem, size = 0x12000, scoped, tag = 'internal scratch']
  #allocation2 [shape = 'f32[1,4,1]{2,1,0:T(4,128)}', space=vmem, size = 0x800, scoped, tag = 'scratch operand']
  %s0 = inlined_call_operand.hbm [shape: f32[2,4,256], index: 0, kind: input, shape index: {}]
  %s1 = inlined_call_operand.hbm [shape: f32[4,256], index: 1, kind: input, shape index: {}]
  %s2 = inlined_call_operand.vmem [shape: f32[2,4,1], index: 2, kind: output, shape index: {}]
  %s3 = sld [smem:[#allocation0]]
  $region57: #{tpu_custom_call.1} parent=0
    _
  %s5 = ssub.s32 1, %s3
  %s6 = scalar_select 0, %s5, %s3
  $region1: #{tpu_custom_call.1} parent=0
    #allocation3 [shape = 'u8[8192]{0}', space=vmem, size = 0x2000, scoped, tag = 'input window, operand 0']
    #allocation4 [shape = 's32[2]{0}', space=sflag, size = 0x8, scoped, tag = 'scoped memory for tpu_custom_call.1']
    #allocation5 [shape = 'u8[4096]{0}', space=vmem, size = 0x1000, scoped, tag = 'input window, operand 1, single buffered']
    #allocation6 [shape = 's32[1]{0}', space=sflag, size = 0x4, scoped, tag = 'scoped memory for tpu_custom_call.1']
    %7 = vsyncpa [#allocation4], 0
    %s8 = scalar_lea.sflag [#allocation4], 1
    %9 = vsyncpa %s8, 0
    %10 = vsyncpa [#allocation6], 0
    loop: start=0, step=1, limit=4
    $region2: #{tpu_custom_call.1} parent=1 // loop_pre_header
      _
    $region3: #{tpu_custom_call.1} parent=1 // loop_header
      %s12 = sphi 0, %s16
      %p13 = scmp.ge.s32.totalorder %s12, 4
      %s19 = sphi 0, %s38
      %s20 = sphi 0, %s34
      %s21 = sphi 0, %s30
      %s22 = sphi 0, %s19
      %s23 = sphi 0, %s20
      %s24 = sphi 0, %s21
      %s25 = sphi 0, %s22
      %s26 = sphi 0, %s23
      %s27 = sphi 0, %s24
      %s45 = sphi 0, %s47
      %s48 = sphi 0, %s45
      %s49 = sphi 0, %s48
      %s65 = sphi 0, %s49
      %s73 = sphi 0, %s75
      %s76 = sphi 0, %s73
      %s77 = sphi 0, %s76
      %s93 = sphi 0, %s77
      %s101 = sphi 0, %s103
      %s104 = sphi 0, %s101
      %s105 = sphi 0, %s104
      %s121 = sphi 0, %s105
    $region4: #{tpu_custom_call.1} parent=1 // loop_header_branch
      %15 = sbr.rel (%p13) target = $region8
    $region5: #{tpu_custom_call.1} parent=1 // loop_body
      %s17 = ssub.s32 %s12, 1
      %s18 = ssub.s32 %s12, 2
      %s28 = sadd.s32 1, %s21
      %p29 = scmp.ge.s32.totalorder %s28, 1
      %s30 = scalar_select %p29, 0, %s28
      %s31 = sadd.s32 1, %s20
      %s32 = scalar_select %p29, %s31, %s20
      %p33 = scmp.ge.s32.totalorder %s32, 2
      %s34 = scalar_select %p33, 0, %s32
      %s35 = sadd.s32 1, %s19
      %s36 = scalar_select %p33, %s35, %s19
      %p37 = scmp.ge.s32.totalorder %s36, 1
      %s38 = scalar_select %p37, 0, %s36
      %s39 = ssub.s32 %s20, %s34
      %s40 = ssub.s32 %s19, %s38
      %s41 = sor.u32 %s39, %s40
      %s42 = ssub.s32 %s21, %s30
      %s43 = sor.u32 %s41, %s42
      %p44 = scmp.eq.s32.totalorder %s43, 0
      %s46 = sadd.s32 %s45, 1
      %s47 = scalar_select %p44, %s45, %s46
      %p50 = pneg %p44
      %p51 = scmp.eq.s32.totalorder %s12, 1
      %p52 = por %p50, %p51
      %p53 = scmp.ne.s32.totalorder %s45, %s48
      %p54 = scmp.eq.s32.totalorder %s12, 0
      %p55 = por %p53, %p54
      %p56 = scmp.ne.s32.totalorder %s45, %s48
      %p57 = scmp.eq.s32.totalorder %s17, 1
      %p58 = por %p56, %p57
      %p59 = scmp.ne.s32.totalorder %s48, %s49
      %p60 = scmp.eq.s32.totalorder %s17, 0
      %p61 = por %p59, %p60
      %p62 = scmp.ne.s32.totalorder %s48, %s49
      %p63 = scmp.eq.s32.totalorder %s18, 1
      %p64 = por %p62, %p63
      %p66 = scmp.ne.s32.totalorder %s49, %s65
      %p67 = scmp.eq.s32.totalorder %s18, 0
      %p68 = por %p66, %p67
      %s69 = ssub.s32 %s19, %s38
      %s70 = ssub.s32 %s21, %s30
      %s71 = sor.u32 %s69, %s70
      %p72 = scmp.eq.s32.totalorder %s71, 0
      %s74 = sadd.s32 %s73, 1
      %s75 = scalar_select %p72, %s73, %s74
      %p78 = pneg %p72
      %p79 = scmp.eq.s32.totalorder %s12, 1
      %p80 = por %p78, %p79
      %p81 = scmp.ne.s32.totalorder %s73, %s76
      %p82 = scmp.eq.s32.totalorder %s12, 0
      %p83 = por %p81, %p82
      %p84 = scmp.ne.s32.totalorder %s73, %s76
      %p85 = scmp.eq.s32.totalorder %s17, 1
      %p86 = por %p84, %p85
      %p87 = scmp.ne.s32.totalorder %s76, %s77
      %p88 = scmp.eq.s32.totalorder %s17, 0
      %p89 = por %p87, %p88
      %p90 = scmp.ne.s32.totalorder %s76, %s77
      %p91 = scmp.eq.s32.totalorder %s18, 1
      %p92 = por %p90, %p91
      %p94 = scmp.ne.s32.totalorder %s77, %s93
      %p95 = scmp.eq.s32.totalorder %s18, 0
      %p96 = por %p94, %p95
      %s97 = ssub.s32 %s20, %s34
      %s98 = ssub.s32 %s19, %s38
      %s99 = sor.u32 %s97, %s98
      %p100 = scmp.eq.s32.totalorder %s99, 0
      %s102 = sadd.s32 %s101, 1
      %s103 = scalar_select %p100, %s101, %s102
      %p106 = pneg %p100
      %p107 = scmp.eq.s32.totalorder %s12, 1
      %p108 = por %p106, %p107
      %p109 = scmp.ne.s32.totalorder %s101, %s104
      %p110 = scmp.eq.s32.totalorder %s12, 0
      %p111 = por %p109, %p110
      %p112 = scmp.ne.s32.totalorder %s101, %s104
      %p113 = scmp.eq.s32.totalorder %s17, 1
      %p114 = por %p112, %p113
      %p115 = scmp.ne.s32.totalorder %s104, %s105
      %p116 = scmp.eq.s32.totalorder %s17, 0
      %p117 = por %p115, %p116
      %p118 = scmp.ne.s32.totalorder %s104, %s105
      %p119 = scmp.eq.s32.totalorder %s18, 1
      %p120 = por %p118, %p119
      %p122 = scmp.ne.s32.totalorder %s105, %s121
      %p123 = scmp.eq.s32.totalorder %s18, 0
      %p124 = por %p122, %p123
      %p125 = scmp.le.s32.totalorder 1, %s12
      %p126 = scmp.lt.s32.totalorder %s12, 3
      %p127 = pnand %p125, %p126
      %p128 = pneg %p127
      // Predicated region
      $region9: #{tpu_custom_call.1} parent=5 // pred_check
        _
      $region10: #{tpu_custom_call.1} parent=5 // pred_check_branch
        %130 = sbr.rel (%p127) target = $region12
      $region11: #{tpu_custom_call.1} parent=5 // pred_region
        %s131 = ssub.s32 %s12, 1
        // Predicated region
        $region13: #{tpu_custom_call.1} parent=11 // pred_check
          %p132 = pneg %p89
        $region14: #{tpu_custom_call.1} parent=11 // pred_check_branch
          %134 = sbr.rel (%p132) target = $region16
        $region15: #{tpu_custom_call.1} parent=11 // pred_region
          %s135 = smul.u32 2, %s24
          %s137 = ssub.s32 128, 128
          %138 = vsyncadd [#allocation6], %s137
          %s139 = smul.addr %s22, 2
          %s140 = sadd.s32 %s135, %s139
          %s141 = smul.addr %s140, 64
          %s142 = scalar_lea.hbm %s1, %s141
          %s144 = sshll.u32 [#allocation5], 4
          %s145 = int_to_ptr.vmem [resolvable:$true] %s144
          %147 = dma.hbm_to_vmem [thread:$0]  %s142, 128, %s145, [#allocation6]
        $region16: #{tpu_custom_call.1} parent=11 // pred_fallthru
          _
      $region12: #{tpu_custom_call.1} parent=5 // pred_fallthru
        _
      %p148 = scmp.lt.s32.totalorder %s12, 2
      // Predicated region
      $region17: #{tpu_custom_call.1} parent=5 // pred_check
        %p149 = pneg %p148
      $region18: #{tpu_custom_call.1} parent=5 // pred_check_branch
        %151 = sbr.rel (%p149) target = $region20
      $region19: #{tpu_custom_call.1} parent=5 // pred_region
        // Predicated region
        $region21: #{tpu_custom_call.1} parent=19 // pred_check
          %p152 = pneg %p55
        $region22: #{tpu_custom_call.1} parent=19 // pred_check_branch
          %154 = sbr.rel (%p152) target = $region24
        $region23: #{tpu_custom_call.1} parent=19 // pred_region
          %s155 = sand.u32 %s45, 1
          %s156 = scalar_lea.sflag [#allocation4], %s155
          %s157 = sand.u32 %s45, 1
          %s158 = smul.addr %s157, 8
          %s159 = scalar_lea.vmem [#allocation3], %s158
          %s160 = smul.u32 2, %s21
          %s162 = ssub.s32 128, 128
          %163 = vsyncadd %s156, %s162
          %s164 = smul.addr %s19, 2
          %s165 = sadd.s32 %s160, %s164
          %s166 = smul.addr %s20, 2
          %s167 = sadd.s32 %s165, %s166
          %s168 = smul.addr %s167, 64
          %s169 = scalar_lea.hbm %s0, %s168
          %s171 = sshll.u32 %s159, 4
          %s172 = int_to_ptr.vmem [resolvable:$true] %s171
          %174 = dma.hbm_to_vmem [thread:$0]  %s169, 128, %s172, %s156
        $region24: #{tpu_custom_call.1} parent=19 // pred_fallthru
          _
      $region20: #{tpu_custom_call.1} parent=5 // pred_fallthru
        _
      %p175 = scmp.le.s32.totalorder 1, %s12
      %p176 = scmp.lt.s32.totalorder %s12, 3
      %p177 = pnand %p175, %p176
      %p178 = pneg %p177
      // Predicated region
      $region25: #{tpu_custom_call.1} parent=5 // pred_check
        _
      $region26: #{tpu_custom_call.1} parent=5 // pred_check_branch
        %180 = sbr.rel (%p177) target = $region28
      $region27: #{tpu_custom_call.1} parent=5 // pred_region
        %s181 = ssub.s32 %s12, 1
        %s182 = sand.u32 %s48, 1
        %s183 = scalar_lea.sflag [#allocation4], %s182
        %s184 = sand.u32 %s48, 1
        %s185 = smul.addr %s184, 8
        %s186 = scalar_lea.vmem [#allocation3], %s185
        // Predicated region
        $region29: #{tpu_custom_call.1} parent=27 // pred_check
          %p187 = pneg %p61
        $region30: #{tpu_custom_call.1} parent=27 // pred_check_branch
          %189 = sbr.rel (%p187) target = $region32
        $region31: #{tpu_custom_call.1} parent=27 // pred_region
          %190 = dma.done %s183, 128
        $region32: #{tpu_custom_call.1} parent=27 // pred_fallthru
          _
        // Predicated region
        $region33: #{tpu_custom_call.1} parent=27 // pred_check
          %p191 = pneg %p89
        $region34: #{tpu_custom_call.1} parent=27 // pred_check_branch
          %193 = sbr.rel (%p191) target = $region36
        $region35: #{tpu_custom_call.1} parent=27 // pred_region
          %194 = dma.done [#allocation6], 128
        $region36: #{tpu_custom_call.1} parent=27 // pred_fallthru
          _
        %s195 = sand.u32 %s48, 1
        %s196 = scalar_lea.sflag [#allocation4], %s195
        %s197 = sand.u32 %s48, 1
        %s198 = smul.addr %s197, 8
        %s199 = scalar_lea.vmem [#allocation3], %s198
        %p200 = pneg %p61
        %p201 = pneg %p58
        %p202 = pneg %p89
        %p203 = pneg %p86
        %p204 = pneg %p117
        %p205 = pneg %p114
        %p206 = scmp.lt.s32.totalorder %s23, 1
        %s207 = scalar_select %p206, %s23, 1
        %p208 = scmp.lt.s32.totalorder %s22, 0
        %s209 = scalar_select %p208, %s22, 0
        %s210 = sadd.s32 %s209, %s207
        %s211 = smul.addr %s210, 4
        %s212 = scalar_lea.vmem %s2, %s211
        %s213 = smul.u32 2, %s24
        %s214 = smul.u32 2, %s24
        %p215 = scmp.lt.s32.totalorder %s23, 1
        %s216 = scalar_select %p215, %s23, 1
        %p217 = scmp.lt.s32.totalorder %s22, 0
        %s218 = scalar_select %p217, %s22, 0
        %s219 = sadd.s32 %s218, %s216
        %s220 = smul.addr %s219, 4
        %s221 = scalar_lea.vmem %s2, %s220
        %p222 = scmp.eq.s32.totalorder %s24, 0
        // Predicated region
        $region37: #{tpu_custom_call.1} parent=27 // pred_check
          %p223 = pneg %p222
        $region38: #{tpu_custom_call.1} parent=27 // pred_check_branch
          %225 = sbr.rel (%p223) target = $region40
        $region39: #{tpu_custom_call.1} parent=27 // pred_region
          %vm226 = vcmask 3072
          %227 = vst.msk [vmem:[#allocation2] sm:$0xf] %vm226, 0.0
        $region40: #{tpu_custom_call.1} parent=27 // pred_fallthru
          _
        %v228 = vld [vmem:[%s186] sm:$0xff]
        %v229 = vld [vmem:[#allocation5] sm:$0xff]
        %v230 = vmul.f32 %v228, %v229
        %v231 = vld [vmem:[#allocation2] sm:$0xf]
        %v233 = vcombine.high %v230, %v230
        %vm235 = vcmask 1043456
        %v236 = vsel %vm235, %v230, 0.0
        %v237 = vsel %vm235, %v233, 0.0
        %v238 = vadd.f32 %v236, %v237
        %239 = vadd.xlane.f32.xlu0 %v238
        %v240 = vpop.xlane.xlu0 %239
        %v241 = vadd.f32 %v231, %v240
        %vm242 = vcmask 3072
        %243 = vst.msk [vmem:[#allocation2] sm:$0xf] %vm242, %v241
        // Predicated region
        $region41: #{tpu_custom_call.1} parent=27 // pred_check
          %p244 = pneg %p222
        $region42: #{tpu_custom_call.1} parent=27 // pred_check_branch
          %246 = sbr.rel (%p244) target = $region44
        $region43: #{tpu_custom_call.1} parent=27 // pred_region
          %v247 = vld [vmem:[#allocation2] sm:$0xf]
          %248 = vst.msk [vmem:[%s221] sm:$0xf] %vm242, %v247
        $region44: #{tpu_custom_call.1} parent=27 // pred_fallthru
          _
        %p249 = scmp.lt.s32.totalorder %s23, 1
        %s250 = scalar_select %p249, %s23, 1
        %p251 = scmp.lt.s32.totalorder %s22, 0
        %s252 = scalar_select %p251, %s22, 0
        %s253 = sadd.s32 %s252, %s250
        %s254 = smul.addr %s253, 4
        %s255 = scalar_lea.vmem %s2, %s254
        // Predicated region
        $region45: #{tpu_custom_call.1} parent=27 // pred_check
          %p256 = pneg %p114
        $region46: #{tpu_custom_call.1} parent=27 // pred_check_branch
          %258 = sbr.rel (%p256) target = $region48
        $region47: #{tpu_custom_call.1} parent=27 // pred_region
          _
        $region48: #{tpu_custom_call.1} parent=27 // pred_fallthru
          _
      $region28: #{tpu_custom_call.1} parent=5 // pred_fallthru
        _
      %p259 = scmp.le.s32.totalorder 2, %s12
      // Predicated region
      $region49: #{tpu_custom_call.1} parent=5 // pred_check
        %p260 = pneg %p259
      $region50: #{tpu_custom_call.1} parent=5 // pred_check_branch
        %262 = sbr.rel (%p260) target = $region52
      $region51: #{tpu_custom_call.1} parent=5 // pred_region
        %s263 = ssub.s32 %s12, 2
        // Predicated region
        $region53: #{tpu_custom_call.1} parent=51 // pred_check
          %p264 = pneg %p120
        $region54: #{tpu_custom_call.1} parent=51 // pred_check_branch
          %266 = sbr.rel (%p264) target = $region56
        $region55: #{tpu_custom_call.1} parent=51 // pred_region
          %p267 = scmp.lt.s32.totalorder %s26, 1
          %s268 = scalar_select %p267, %s26, 1
          %p269 = scmp.lt.s32.totalorder %s25, 0
          %s270 = scalar_select %p269, %s25, 0
          %s271 = sadd.s32 %s270, %s268
          %s272 = smul.addr %s271, 4
          %s273 = scalar_lea.vmem %s2, %s272
        $region56: #{tpu_custom_call.1} parent=51 // pred_fallthru
          _
      $region52: #{tpu_custom_call.1} parent=5 // pred_fallthru
        _
    $region6: #{tpu_custom_call.1} parent=1 // loop_footer
      %s16 = sadd.s32 1, %s12
    $region7: #{tpu_custom_call.1} parent=1 // loop_footer_branch
      %11 = sbr.rel target = $region3
    $region8: #{tpu_custom_call.1} parent=1 // loop_exit
      _
    %274 = vsyncpa [#allocation4], 1
    %s275 = scalar_lea.sflag [#allocation4], 1
    %276 = vsyncpa %s275, 1
    %277 = vsyncpa [#allocation6], 1

</llo_original>
